<compile_context>
chip_gen: v6e
topology: v6e:2x2x1
jax: 0.10.0
libtpu: 0.0.40
codegen_flags: <defaults>
</compile_context>

<pallas_src>
import functools

import jax
import jax.numpy as jnp
from jax.experimental import pallas as pl
from jax.experimental.pallas import tpu as pltpu

_MIB = 1024 * 1024


def _tv_loss_ref(x, tv_loss_weight=1.0):
    """Pure-JAX reference mirroring the PyTorch module (also used as fallback)."""
    n, c, h, w = x.shape
    count_h = c * (h - 1) * w
    count_w = c * h * (w - 1)
    xf = x.astype(jnp.float32)
    h_tv = jnp.sum((xf[:, :, 1:, :] - xf[:, :, :-1, :]) ** 2)
    w_tv = jnp.sum((xf[:, :, :, 1:] - xf[:, :, :, :-1]) ** 2)
    return tv_loss_weight * 2.0 * (h_tv / count_h + w_tv / count_w) / n


def _vmem_capacity_bytes():
    # Trace-time hardware query; fall back to the smallest per-core VMEM
    # across supported generations (v7x: 64 MiB per TensorCore) if unavailable.
    try:
        return int(pltpu.get_tpu_info().vmem_capacity_bytes)
    except Exception:
        return 64 * _MIB


def _choose_tiling(lane, itemsize):
    phys = _vmem_capacity_bytes()
    if phys >= 128 * _MIB:                 # v5e / v6e: 128 MiB VMEM per core
        vmem_limit = 64 * _MIB
    else:                                  # v7x: 64 MiB per TensorCore
        vmem_limit = min(48 * _MIB, (phys * 3) // 4)
    usable = max(0, vmem_limit - 8 * _MIB)  # headroom for outputs/overheads
    # Per-element cost per step: double-buffered input (native dtype) plus
    # roughly 4 live f32 intermediates (cast, rolled copy, diff, product).
    per_elem = 2 * itemsize + 4 * 4
    # Sub-32-bit dtypes pack along sublanes: keep row counts tile-aligned.
    row_align = {4: 8, 2: 16, 1: 32}.get(itemsize, 8)
    tb_cap = ((usable // per_elem) // lane) // row_align * row_align
    return vmem_limit, row_align, tb_cap


def _round_up(a, b):
    return -(-a // b) * b


def _tv_kernel(x_ref, mask_ref, out_ref, *, lane, w_cols,
               inv_count_h, inv_count_w):
    # x_ref: (TB, H*W) tile holding TB flattened (H, W) slices.
    # mask_ref: resident (2, H*W) f32 keep-masks (row 0: horizontal, row 1: vertical).
    x = x_ref[...].astype(jnp.float32)                       # (TB, L)

    # Horizontal neighbour x[p+1 mod L] via XLU lane rotation: everything
    # stays (8,128)-aligned (no off-by-one slice copies / masked stores).
    dw = pltpu.roll(x, lane - 1, axis=1) - x                  # d[p] = x[p+1] - x[p]
    w_sum = jnp.sum(dw * dw * mask_ref[0:1, :])               # wrap cols masked

    # Vertical neighbour x[p+W mod L] via rotation by W.
    dh = pltpu.roll(x, lane - w_cols, axis=1) - x             # d[p] = x[p+W] - x[p]
    h_sum = jnp.sum(dh * dh * mask_ref[1:2, :])               # last image row masked

    out_ref[...] = (h_sum * inv_count_h + w_sum * inv_count_w).reshape(1, 1, 1)


def tv_loss(x, tv_loss_weight=1.0):
    """Total variation loss matching PyTorch TVLoss.forward semantics.

    x: (N, C, H, W) array. Returns a scalar float32.
    """
    n, c, h, w = x.shape
    m = n * c
    lane = h * w
    itemsize = jnp.dtype(x.dtype).itemsize

    vmem_limit, row_align, tb_cap = _choose_tiling(lane, itemsize)
    if tb_cap < row_align:
        # TODO(synk): lane-dimension tiling (W-multiple blocks with a halo) for
        # very large H*W images; fall back to plain XLA there rather than fake it.
        return _tv_loss_ref(x, tv_loss_weight)

    m_align = _round_up(m, row_align)
    num_blocks = -(-m_align // min(tb_cap, m_align))
    # v7x has two TensorCores: keep the "parallel" grid axis even so the work
    # splits evenly, as long as there is more than one row-group of work.
    if num_blocks % 2 == 1 and m_align >= 2 * row_align:
        num_blocks += 1
    tb = _round_up(-(-m_align // num_blocks), row_align)
    m_total = tb * num_blocks

    x_flat = x.reshape(m, lane)
    if m_total != m:
        # Zero-padded rows contribute exactly zero to both sums.
        x_flat = jnp.pad(x_flat, ((0, m_total - m), (0, 0)))

    # Resident (2, H*W) keep-masks: row 0 kills the column-wrap positions of
    # the horizontal diffs, row 1 kills the last image row of the vertical diffs.
    pos = jnp.arange(lane, dtype=jnp.int32)
    masks = jnp.stack(
        [(pos % w != w - 1).astype(jnp.float32),
         (pos < lane - w).astype(jnp.float32)],
        axis=0,
    )

    count_h = c * (h - 1) * w
    count_w = c * h * (w - 1)
    # TODO(synk): h == 1 or w == 1 yields inf/nan, matching PyTorch TVLoss.
    inv_count_h = (1.0 / count_h) if count_h else float("inf")
    inv_count_w = (1.0 / count_w) if count_w else float("inf")

    kernel = functools.partial(
        _tv_kernel, lane=lane, w_cols=w,
        inv_count_h=inv_count_h, inv_count_w=inv_count_w)

    partial_sums = pl.pallas_call(
        kernel,
        out_shape=jax.ShapeDtypeStruct((num_blocks, 1, 1), jnp.float32),
        grid_spec=pltpu.PrefetchScalarGridSpec(
            num_scalar_prefetch=0,
            grid=(num_blocks,),
            in_specs=[
                pl.BlockSpec((tb, lane), lambda i: (i, 0)),
                pl.BlockSpec((2, lane), lambda i: (0, 0)),   # resident masks
            ],
            out_specs=pl.BlockSpec((1, 1, 1), lambda i: (i, 0, 0)),
        ),
        compiler_params=pltpu.CompilerParams(
            dimension_semantics=("parallel",),
            vmem_limit_bytes=vmem_limit,
        ),
        cost_estimate=pl.CostEstimate(
            flops=8 * m_total * lane,
            transcendentals=0,
            bytes_accessed=m_total * lane * itemsize + 2 * lane * 4
            + num_blocks * 4,
        ),
    )(x_flat, masks)

    # Tiny final reduction over per-block partials (already normalised by
    # count_h / count_w inside the kernel).
    total = jnp.sum(partial_sums)
    return (tv_loss_weight * 2.0 / n) * total


if __name__ == "__main__":
    key = jax.random.PRNGKey(0)
    x = jax.random.normal(key, (2, 4, 16, 16), dtype=jnp.float32)

    out = tv_loss(x, tv_loss_weight=1.0)
    out = jax.block_until_ready(out)

    ref = _tv_loss_ref(x, tv_loss_weight=1.0)
    assert jnp.allclose(out, ref, rtol=1e-5, atol=1e-5), (out, ref)
    print("KERNEL_OK")
</pallas_src>

<mosaic_0001>
module attributes {stable_mosaic.version = 11 : i64} {
  func.func @_tv_kernel(%arg0: i32, %arg1: memref<8x256xf32, #tpu.memory_space<vmem>>, %arg2: memref<2x256xf32, #tpu.memory_space<vmem>>, %arg3: memref<1x1x1xf32, #tpu.memory_space<vmem>>) attributes {dimension_semantics = [#tpu.dimension_semantics<parallel>], iteration_bounds = array<i64: 1>, scalar_prefetch = 0 : i64, scratch_operands = 0 : i64, tpu.core_type = #tpu.core_type<tc>, window_params = [{transform_indices = @transform_0, window_bounds = array<i64: 8, 256>}, {pipeline_mode = #tpu.pipeline_mode<synchronous>, transform_indices = @transform_1, window_bounds = array<i64: 2, 256>}, {transform_indices = @transform_2, window_bounds = array<i64: 1, 1, 1>}]} {
    %c0 = arith.constant 0 : index
    %c0_0 = arith.constant 0 : index
    %0 = vector.load %arg1[%c0, %c0_0] : memref<8x256xf32, #tpu.memory_space<vmem>>, vector<8x256xf32>
    %c255_i32 = arith.constant 255 : i32
    %1 = tpu.dynamic_rotate %0 by %c255_i32 dim 1 : vector<8x256xf32>, i32 -> vector<8x256xf32>
    %2 = arith.subf %1, %0 : vector<8x256xf32>
    %3 = arith.mulf %2, %2 : vector<8x256xf32>
    %c0_1 = arith.constant 0 : index
    %c0_2 = arith.constant 0 : index
    %4 = vector.load %arg2[%c0_1, %c0_2] : memref<2x256xf32, #tpu.memory_space<vmem>>, vector<1x256xf32>
    %5 = vector.broadcast %4 : vector<1x256xf32> to vector<8x256xf32>
    %6 = arith.mulf %3, %5 : vector<8x256xf32>
    %7 = vector.shape_cast %6 : vector<8x256xf32> to vector<1x8x256xf32>
    %cst = arith.constant dense<0.000000e+00> : vector<1xf32>
    %8 = vector.multi_reduction <add>, %7, %cst [1, 2] : vector<1x8x256xf32> to vector<1xf32>
    %9 = vector.shape_cast %8 : vector<1xf32> to vector<1x1x1xf32>
    %10 = vector.extract %9[0, 0, 0] : f32 from vector<1x1x1xf32>
    %c240_i32 = arith.constant 240 : i32
    %11 = tpu.dynamic_rotate %0 by %c240_i32 dim 1 : vector<8x256xf32>, i32 -> vector<8x256xf32>
    %12 = arith.subf %11, %0 : vector<8x256xf32>
    %13 = arith.mulf %12, %12 : vector<8x256xf32>
    %c1 = arith.constant 1 : index
    %c0_3 = arith.constant 0 : index
    %14 = vector.load %arg2[%c1, %c0_3] : memref<2x256xf32, #tpu.memory_space<vmem>>, vector<1x256xf32>
    %15 = vector.broadcast %14 : vector<1x256xf32> to vector<8x256xf32>
    %16 = arith.mulf %13, %15 : vector<8x256xf32>
    %17 = vector.shape_cast %16 : vector<8x256xf32> to vector<1x8x256xf32>
    %cst_4 = arith.constant dense<0.000000e+00> : vector<1xf32>
    %18 = vector.multi_reduction <add>, %17, %cst_4 [1, 2] : vector<1x8x256xf32> to vector<1xf32>
    %19 = vector.shape_cast %18 : vector<1xf32> to vector<1x1x1xf32>
    %20 = vector.extract %19[0, 0, 0] : f32 from vector<1x1x1xf32>
    %cst_5 = arith.constant 0.00104166672 : f32
    %21 = arith.mulf %20, %cst_5 : f32
    %cst_6 = arith.constant 0.00104166672 : f32
    %22 = arith.mulf %10, %cst_6 : f32
    %23 = arith.addf %21, %22 : f32
    %24 = vector.broadcast %23 : f32 to vector<1x1x1xf32>
    %c0_7 = arith.constant 0 : index
    %c0_8 = arith.constant 0 : index
    %c0_9 = arith.constant 0 : index
    %25 = vector.load %arg3[%c0_7, %c0_8, %c0_9] : memref<1x1x1xf32, #tpu.memory_space<vmem>>, vector<1x1x1xf32>
    tpu.vector_store %arg3[%c0_7, %c0_8, %c0_9], %24 {strides = array<i32>} : memref<1x1x1xf32, #tpu.memory_space<vmem>>, vector<1x1x1xf32>,
    return
  }
  func.func @transform_0(%arg0: i32) -> (i32, i32) {
    %c0_i32 = arith.constant 0 : i32
    %c0_i32_0 = arith.constant 0 : i32
    return %arg0, %c0_i32 : i32, i32
  }
  func.func @transform_1(%arg0: i32) -> (i32, i32) {
    %c0_i32 = arith.constant 0 : i32
    %c0_i32_0 = arith.constant 0 : i32
    %c0_i32_1 = arith.constant 0 : i32
    return %c0_i32, %c0_i32_0 : i32, i32
  }
  func.func @transform_2(%arg0: i32) -> (i32, i32, i32) {
    %c0_i32 = arith.constant 0 : i32
    %c0_i32_0 = arith.constant 0 : i32
    %c0_i32_1 = arith.constant 0 : i32
    return %arg0, %c0_i32, %c0_i32_0 : i32, i32, i32
  }
}

</mosaic_0001>

<llo_original>
// kernel: tpu_custom_call.1
$region0: #{tpu_custom_call.1}
  #allocation0 [shape = 'u32[]', space=smem, size = 0x4, offset = 0x4, fixed_abs, tag = 'smem constant byte address 0x4 - core index']
  #allocation1 [shape = 'u32[144,128]{1,0:T(1,128)}', space=vmem, size = 0x12000, scoped, tag = 'internal scratch']
  %s0 = inlined_call_operand.hbm [shape: f32[8,256], index: 0, kind: input, shape index: {}]
  %s1 = inlined_call_operand.hbm [shape: f32[2,256], index: 1, kind: input, shape index: {}]
  %s2 = inlined_call_operand.hbm [shape: f32[1,1,1], index: 2, kind: output, shape index: {}]
  %s3 = sld [smem:[#allocation0]]
  $region26: #{tpu_custom_call.1} parent=0
    _
  %s5 = ssub.s32 1, %s3
  %s6 = scalar_select 0, %s5, %s3
  $region1: #{tpu_custom_call.1} parent=0
    #allocation2 [shape = 'u8[8192]{0}', space=vmem, size = 0x2000, scoped, tag = 'input window, operand 0, single buffered']
    #allocation3 [shape = 's32[1]{0}', space=sflag, size = 0x4, scoped, tag = 'scoped memory for tpu_custom_call.1']
    #allocation4 [shape = 's32[1]{0}', space=sflag, size = 0x4, scoped, tag = 'scoped memory for tpu_custom_call.1']
    #allocation5 [shape = 'u8[2048]{0}', space=vmem, size = 0x800, scoped, tag = 'input window, operand 1, single buffered']
    #allocation6 [shape = 's32[1]{0}', space=sflag, size = 0x4, scoped, tag = 'scoped memory for tpu_custom_call.1']
    #allocation7 [shape = 'u8[512]{0}', space=vmem, size = 0x400, scoped, tag = 'output window, operand 0, single buffered']
    %7 = vsyncpa [#allocation3], 0
    %8 = vsyncpa [#allocation6], 0
    %9 = vsyncpa [#allocation4], 0
    // Predicated region
    $region2: #{tpu_custom_call.1} parent=1 // pred_check
      _
    $region3: #{tpu_custom_call.1} parent=1 // pred_check_branch
      %11 = sbr.rel (0) target = $region5
    $region4: #{tpu_custom_call.1} parent=1 // pred_region
      %s13 = ssub.s32 256, 256
      %14 = vsyncadd [#allocation3], %s13
      %s16 = sshll.u32 [#allocation2], 4
      %s17 = int_to_ptr.vmem [resolvable:$true] %s16
      %19 = dma.hbm_to_vmem [thread:$0]  %s0, 256, %s17, [#allocation3]
    $region5: #{tpu_custom_call.1} parent=1 // pred_fallthru
      _
    // Predicated region
    $region6: #{tpu_custom_call.1} parent=1 // pred_check
      _
    $region7: #{tpu_custom_call.1} parent=1 // pred_check_branch
      %21 = sbr.rel (0) target = $region9
    $region8: #{tpu_custom_call.1} parent=1 // pred_region
      %s23 = ssub.s32 64, 64
      %24 = vsyncadd [#allocation6], %s23
      %s26 = sshll.u32 [#allocation5], 4
      %s27 = int_to_ptr.vmem [resolvable:$true] %s26
      %29 = dma.hbm_to_vmem [thread:$0]  %s1, 64, %s27, [#allocation6]
    $region9: #{tpu_custom_call.1} parent=1 // pred_fallthru
      _
    // Predicated region
    $region10: #{tpu_custom_call.1} parent=1 // pred_check
      _
    $region11: #{tpu_custom_call.1} parent=1 // pred_check_branch
      %31 = sbr.rel (0) target = $region13
    $region12: #{tpu_custom_call.1} parent=1 // pred_region
      %32 = dma.done [#allocation3], 256
    $region13: #{tpu_custom_call.1} parent=1 // pred_fallthru
      _
    // Predicated region
    $region14: #{tpu_custom_call.1} parent=1 // pred_check
      _
    $region15: #{tpu_custom_call.1} parent=1 // pred_check_branch
      %34 = sbr.rel (0) target = $region17
    $region16: #{tpu_custom_call.1} parent=1 // pred_region
      %35 = dma.done [#allocation6], 64
    $region17: #{tpu_custom_call.1} parent=1 // pred_fallthru
      _
    %v36 = vld [vmem:[#allocation2] sm:$0xff]
    %v37 = vld [vmem:[#allocation2 + $0x8] sm:$0xff]
    %38 = vrot.lane.b32.xlu0 %v36, 127
    %v39 = vpop.permute.xlu0 %38
    %40 = vrot.lane.b32.xlu0 %v37, 127
    %v41 = vpop.permute.xlu0 %40
    %v42 = vlaneseq
    %v43 = vand.u32 %v42, 127
    %vm44 = vcmp.lt.s32.totalorder %v43, 127
    %v45 = vsel %vm44, %v39, %v41
    %v46 = vsel %vm44, %v41, %v39
    %v47 = vsub.f32 %v45, %v36
    %v48 = vsub.f32 %v46, %v37
    %v49 = vmul.f32 %v47, %v47
    %v50 = vmul.f32 %v48, %v48
    %v51 = vld [vmem:[#allocation5] ss:$2 sm:$0x3]
    %v53 = vlaneseq
    %v54 = vshrl.u32 %v53, 7
    %v55 = vsub.s32 0, %v54
    %v56 = vrot.slane %v51, %v55
    %v57 = vlaneseq
    %v58 = vshrl.u32 %v57, 7
    %v59 = vsub.s32 1, %v58
    %v60 = vrot.slane %v51, %v59
    %v63 = vmul.f32 %v49, %v56
    %v64 = vmul.f32 %v50, %v60
    %v65 = vadd.f32 %v63, %v64
    %66 = vadd.xlane.f32.xlu0 %v65
    %v67 = vpop.xlane.xlu0 %66
    %v68 = vrot.slane %v67, 4
    %v69 = vadd.f32 %v67, %v68
    %v70 = vrot.slane %v69, 2
    %v71 = vadd.f32 %v69, %v70
    %v72 = vrot.slane %v71, 1
    %v73 = vadd.f32 %v71, %v72
    %s74 = vtos %v73
    %75 = vrot.lane.b32.xlu0 %v36, 112
    %v76 = vpop.permute.xlu0 %75
    %77 = vrot.lane.b32.xlu0 %v37, 112
    %v78 = vpop.permute.xlu0 %77
    %vm79 = vcmp.lt.s32.totalorder %v43, 112
    %v80 = vsel %vm79, %v76, %v78
    %v81 = vsel %vm79, %v78, %v76
    %v82 = vsub.f32 %v80, %v36
    %v83 = vsub.f32 %v81, %v37
    %v84 = vmul.f32 %v82, %v82
    %v85 = vmul.f32 %v83, %v83
    %s86 = scalar_lea.vmem [#allocation5], 1
    %v87 = vld [vmem:[%s86] ss:$2 sm:$0x3]
    %v89 = vlaneseq
    %v90 = vshrl.u32 %v89, 7
    %v91 = vsub.s32 0, %v90
    %v92 = vrot.slane %v87, %v91
    %v93 = vlaneseq
    %v94 = vshrl.u32 %v93, 7
    %v95 = vsub.s32 1, %v94
    %v96 = vrot.slane %v87, %v95
    %v99 = vmul.f32 %v84, %v92
    %v100 = vmul.f32 %v85, %v96
    %v101 = vadd.f32 %v99, %v100
    %102 = vadd.xlane.f32.xlu0 %v101
    %v103 = vpop.xlane.xlu0 %102
    %v104 = vrot.slane %v103, 4
    %v105 = vadd.f32 %v103, %v104
    %v106 = vrot.slane %v105, 2
    %v107 = vadd.f32 %v105, %v106
    %v108 = vrot.slane %v107, 1
    %v109 = vadd.f32 %v107, %v108
    %s110 = vtos %v109
    %s111 = smul.f32 %s110, 0.0010416667
    %s112 = smul.f32 %s74, 0.0010416667
    %s113 = sadd.f32 %s111, %s112
    %v114 = vstv %s113
    %vm115 = vcmask 0
    %116 = vst.msk [vmem:[#allocation7] sm:$0x1] %vm115, %v114
    // Predicated region
    $region18: #{tpu_custom_call.1} parent=1 // pred_check
      _
    $region19: #{tpu_custom_call.1} parent=1 // pred_check_branch
      %118 = sbr.rel (0) target = $region21
    $region20: #{tpu_custom_call.1} parent=1 // pred_region
      %s120 = ssub.s32 16, 16
      %121 = vsyncadd [#allocation4], %s120
      %s123 = sshll.u32 [#allocation7], 4
      %s124 = int_to_ptr.vmem [resolvable:$true] %s123
      %126 = dma.vmem_to_hbm [thread:$0]  %s124, 16, %s2, [#allocation4]
    $region21: #{tpu_custom_call.1} parent=1 // pred_fallthru
      _
    // Predicated region
    $region22: #{tpu_custom_call.1} parent=1 // pred_check
      _
    $region23: #{tpu_custom_call.1} parent=1 // pred_check_branch
      %128 = sbr.rel (0) target = $region25
    $region24: #{tpu_custom_call.1} parent=1 // pred_region
      %129 = dma.done [#allocation4], 16
    $region25: #{tpu_custom_call.1} parent=1 // pred_fallthru
      _
    %130 = vsyncpa [#allocation3], 1
    %131 = vsyncpa [#allocation6], 1
    %132 = vsyncpa [#allocation4], 1

</llo_original>
